<compile_context>
chip_gen: v5e
topology: v5e:2x2
jax: 0.10.0
libtpu: 0.0.40
codegen_flags: <defaults>
</compile_context>

<pallas_src>
import functools

import jax
import jax.numpy as jnp
from jax.experimental import pallas as pl
from jax.experimental.pallas import tpu as pltpu

W_BITS = 4
A_BITS = 4


# ----------------------- quantizer semantics (host glue) ---------------------
def qtanh_quantize(w, w_bits):
    """qf.QTanh(w_bits): DoReFa-style tanh weight quantizer (parameter setup)."""
    t = jnp.tanh(w.astype(jnp.float32))
    t = t / jnp.max(jnp.abs(t))                       # -> [-1, 1]
    n = float(2 ** w_bits - 1)
    q = jnp.round((0.5 * t + 0.5) * n) / n            # k-bit uniform grid in [0, 1]
    return (2.0 * q - 1.0).astype(jnp.float32)        # back to [-1, 1]


def fold_bn(gamma, beta, mean, var, eps=1e-5):
    """Fold inference-mode BatchNorm into per-channel scale / bias (1-D, f32)."""
    scale = gamma / jnp.sqrt(var + eps)
    bias = beta - mean * scale
    return scale.astype(jnp.float32), bias.astype(jnp.float32)


# ----------------------- in-kernel activation quantizer ----------------------
_LOG2_ROUND = (1 << 23) - 3474676   # 2^23 - round((sqrt(2) - 1) * 2^23)


def _log_quant_unsigned(x, a_bits, out_dtype):
    """qf.LogQuant(a_bits, unsigned=True): snap x>0 to the nearest power of two
    (rounding in log2 space), exponent clipped to [1 - 2**a_bits, 0]; x<=0 -> 0.

    VPU-integer-only hot path: round(log2(x)) is a single carry-add into the f32
    exponent field (mantissa >= (sqrt(2)-1)*2^23 carries and bumps the exponent).
    The cast to the consumer dtype (bf16 for the conv2 operand / kernel output) is
    fused into the final select; powers of two in [2^-15, 1] are exact in bf16."""
    emin = 1 - (1 << a_bits)
    bits = pltpu.bitcast(x, jnp.int32)                     # x >= 0 post-ReLU
    exp = ((bits + jnp.int32(_LOG2_ROUND)) >> 23) - 127    # round(log2(x)) via carry
    exp = jnp.clip(exp, emin, 0)
    pow2 = pltpu.bitcast((exp + 127) << 23, jnp.float32)
    return jnp.where(x > 0.0, pow2, 0.0).astype(out_dtype)


# ------------------------------- fused kernel ---------------------------------
def _qblock_fused_kernel(x_ref, m_ref, w1_ref, b1_ref, w2_ref, b2_ref, o_ref,
                         xh_ref, stk_ref,
                         *, TH, W, Cin, Cmid, Cout, a_bits, n_row_tiles):
    # x_ref  : (1, Cin, H*W)     f32   raw input plane (resident across row tiles)
    # m_ref  : (2, THW)          f32   column-wrap kill masks for the kw=0 / kw=2 groups
    # w1_ref : (3, Cmid, 3*Cin)  bf16  3x3 weights grouped per kw, BN1 scale folded in
    # w2_ref : (Cout, Cmid)      bf16  1x1 weights, BN2 scale folded in
    # b1/b2  : (C, 1)            f32   BatchNorm biases
    # o_ref  : (1, Cout, THW)    bf16  lane-dense output row tile
    # xh_ref : (Cin, THW+2W+2)   bf16  halo'd row tile (built in-kernel)
    # stk_ref: (3*Cin, THW)      bf16  kh-stacked conv1 operand (K = 3*Cin)
    THW = TH * W
    P = W + 1                                          # halo width on each side
    r = pl.program_id(1)
    if n_row_tiles == 1:
        row_base = 0                                   # fully static slices
    else:
        row_base = pl.multiple_of(r * THW, 128)        # chooser guarantees THW % 128 == 0

    # ---- build the halo'd bf16 tile in VMEM (no host-side pad / cast pre-pass) ----
    xh_ref[:, 0:P] = jnp.zeros((Cin, P), jnp.bfloat16)
    xh_ref[:, P + THW:P + THW + P] = jnp.zeros((Cin, P), jnp.bfloat16)
    xh_ref[:, P:P + THW] = x_ref[0, :, pl.ds(row_base, THW)].astype(jnp.bfloat16)
    if n_row_tiles > 1:
        @pl.when(r > 0)
        def _():                                       # last row of the previous tile
            xh_ref[:, 1:P] = x_ref[0, :, pl.ds(row_base - W, W)].astype(jnp.bfloat16)

        @pl.when(r < n_row_tiles - 1)
        def _():                                       # first row of the next tile
            xh_ref[:, P + THW:P + THW + W] = (
                x_ref[0, :, pl.ds(row_base + THW, W)].astype(jnp.bfloat16))

    # ---- conv1 (3x3, pad=1): one K=3*Cin matmul per kw column ----------------------
    # Stacking the three kh windows along the contraction axis goes through a tiny
    # VMEM scratch (guaranteed lowering; ld/st slots have slack), so the MXU performs
    # the kh accumulation.  Column-wrap elements are killed post-dot with a per-lane
    # f32 mask (exact: the mask broadcasts over the contraction dim).
    acc = None
    for kw in range(3):
        for kh in range(3):
            s = kh * W + kw
            stk_ref[kh * Cin:(kh + 1) * Cin, :] = xh_ref[:, s:s + THW]
        part = jnp.dot(w1_ref[kw], stk_ref[...],
                       preferred_element_type=jnp.float32)          # (Cmid, THW) f32
        if kw == 0:
            part = part * m_ref[0:1, :]
        elif kw == 2:
            part = part * m_ref[1:2, :]
        acc = part if acc is None else acc + part

    # epilogue kept in f32 (v5e VPU has no bf16); bias-only BN since scales are in w.
    h = jnp.maximum(acc + b1_ref[...], 0.0)             # BN1 bias + ReLU
    h = _log_quant_unsigned(h, a_bits, jnp.bfloat16)    # LogQuant -> bf16 (exact)

    # ---- conv2 (1x1) fused: intermediate never leaves VMEM -------------------------
    y = jnp.dot(w2_ref[...], h, preferred_element_type=jnp.float32)  # (Cout, THW) f32
    y = jnp.maximum(y + b2_ref[...], 0.0)               # BN2 bias + ReLU
    y = _log_quant_unsigned(y, a_bits, jnp.bfloat16)    # LogQuant -> bf16 output

    o_ref[...] = y.reshape(1, Cout, THW)


# ------------------------------- tiling helpers --------------------------------
def _round_up(x, m):
    return (x + m - 1) // m * m


def _vmem_capacity_bytes():
    # v5e / v6e: 128 MiB VMEM per TensorCore; v7x: 64 MiB.
    try:
        return int(pltpu.get_tpu_info().vmem_capacity_bytes)
    except Exception:
        return 64 * 1024 * 1024            # conservative default (v7x per-core)


def _choose_row_tile(N, H, W, Cin, Cmid, Cout, vmem_cap):
    """Largest row tile TH (divisor of H, 128-lane aligned output block) whose per-step
    VMEM footprint fits a generation-aware budget.  If the batch alone cannot occupy
    both v7x TensorCores, prefer >= 2 row tiles."""
    budget = max(8 << 20, min(vmem_cap // 3, 48 << 20))
    HW = H * W
    x_bytes = 2 * _round_up(Cin, 8) * _round_up(HW, 128) * 4        # resident f32 plane, 2 bufs

    def est(TH):
        thw = TH * W
        halo = thw + 2 * (W + 1)
        out_bytes = 2 * _round_up(Cout, 16) * _round_up(thw, 128) * 2   # bf16 out tile, 2 bufs
        xh_bytes = _round_up(Cin, 16) * _round_up(halo, 128) * 2
        stk_bytes = _round_up(3 * Cin, 16) * _round_up(thw, 128) * 2
        tmp_bytes = thw * (10 * Cmid + 6 * Cout + 16)                    # live f32/bf16 temps
        return x_bytes + out_bytes + xh_bytes + stk_bytes + tmp_bytes + (1 << 20)

    cands = [t for t in range(1, H + 1)
             if H % t == 0 and (t == H or (t * W) % 128 == 0)]
    fitting = [t for t in cands if est(t) <= budget]
    pool = fitting if fitting else [min(cands)]
    if N < 2:                               # v7x: 2 TCs shard the "parallel" grid axes
        multi = [t for t in pool if H // t >= 2]
        if multi:
            pool = multi
    TH = max(pool)
    # TODO(synk): if even the smallest tile (dominated by the resident f32 plane) blows
    #             VMEM, switch the input to manual halo DMA (pl.ANY + make_async_copy).
    vmem_limit = int(min(max(2 * est(TH), 16 << 20), int(0.9 * vmem_cap)))
    return TH, H // TH, vmem_limit


# ------------------------------- wrapper --------------------------------------
def init_qblock_params(key, in_planes, out_planes, cfg=None):
    mid = cfg if cfg else in_planes
    ks = jax.random.split(key, 8)
    return dict(
        w1=0.1 * jax.random.normal(ks[0], (mid, in_planes, 3, 3), jnp.float32),
        w2=0.1 * jax.random.normal(ks[1], (out_planes, mid, 1, 1), jnp.float32),
        bn1_gamma=1.0 + 0.1 * jax.random.normal(ks[2], (mid,), jnp.float32),
        bn1_beta=0.1 * jax.random.normal(ks[3], (mid,), jnp.float32),
        bn1_mean=0.1 * jax.random.normal(ks[4], (mid,), jnp.float32),
        bn1_var=jnp.abs(jax.random.normal(ks[5], (mid,), jnp.float32)) + 0.5,
        bn2_gamma=1.0 + 0.1 * jax.random.normal(ks[6], (out_planes,), jnp.float32),
        bn2_beta=0.1 * jax.random.normal(ks[7], (out_planes,), jnp.float32),
        bn2_mean=jnp.zeros((out_planes,), jnp.float32),
        bn2_var=jnp.ones((out_planes,), jnp.float32),
    )


def qblock_forward(x_nchw, params, *, w_bits=W_BITS, a_bits=A_BITS, stride=1):
    N, Cin, H, W = x_nchw.shape

    # ---- host glue: weight quantization + BatchNorm folding (scales -> weights) ----
    w1q = qtanh_quantize(params["w1"], w_bits)                    # (Cmid, Cin, 3, 3)
    Cmid = w1q.shape[0]
    w2q = qtanh_quantize(params["w2"], w_bits)                    # (Cout, Cmid, 1, 1)
    Cout = w2q.shape[0]
    s1, b1 = fold_bn(params["bn1_gamma"], params["bn1_beta"],
                     params["bn1_mean"], params["bn1_var"])
    s2, b2 = fold_bn(params["bn2_gamma"], params["bn2_beta"],
                     params["bn2_mean"], params["bn2_var"])
    # BN scales folded into the bf16 weights (kernel keeps only bias adds); the bf16
    # rounding of s*w (~2^-8 relative) is hidden by the LogQuant power-of-two snap.
    w1g = jnp.transpose(w1q * s1.reshape(-1, 1, 1, 1), (3, 0, 2, 1))   # (kw, Cmid, kh, Cin)
    w1g = w1g.reshape(3, Cmid, 3 * Cin).astype(jnp.bfloat16)
    w2m = (w2q.reshape(Cout, Cmid) * s2.reshape(-1, 1)).astype(jnp.bfloat16)
    b1c = b1.reshape(Cmid, 1)
    b2c = b2.reshape(Cout, 1)

    # ---- raw NCHW input, flattened spatial; halo + bf16 cast happen in-kernel ------
    x_flat = x_nchw.astype(jnp.float32).reshape(N, Cin, H * W)

    vmem_cap = _vmem_capacity_bytes()
    TH, n_row_tiles, vmem_limit = _choose_row_tile(N, H, W, Cin, Cmid, Cout, vmem_cap)
    THW = TH * W

    col = jnp.arange(THW, dtype=jnp.int32) % W
    edge_mask = jnp.stack([col != 0, col != W - 1], axis=0).astype(jnp.float32)

    out_flat = pl.pallas_call(
        functools.partial(_qblock_fused_kernel, TH=TH, W=W, Cin=Cin, Cmid=Cmid,
                          Cout=Cout, a_bits=a_bits, n_row_tiles=n_row_tiles),
        out_shape=jax.ShapeDtypeStruct((N, Cout, H * W), jnp.bfloat16),
        grid=(N, n_row_tiles),
        in_specs=[
            pl.BlockSpec((1, Cin, H * W), lambda n, r: (n, 0, 0)),    # input plane (resident)
            pl.BlockSpec((2, THW), lambda n, r: (0, 0)),              # column-wrap masks
            pl.BlockSpec((3, Cmid, 3 * Cin), lambda n, r: (0, 0, 0)),  # conv1 weights (per kw)
            pl.BlockSpec((Cmid, 1), lambda n, r: (0, 0)),             # bn1 bias
            pl.BlockSpec((Cout, Cmid), lambda n, r: (0, 0)),          # conv2 weights
            pl.BlockSpec((Cout, 1), lambda n, r: (0, 0)),             # bn2 bias
        ],
        out_specs=pl.BlockSpec((1, Cout, THW), lambda n, r: (n, 0, r)),
        scratch_shapes=[
            pltpu.VMEM((Cin, THW + 2 * (W + 1)), jnp.bfloat16),       # halo'd row tile
            pltpu.VMEM((3 * Cin, THW), jnp.bfloat16),                 # kh-stacked operand
        ],
        compiler_params=pltpu.CompilerParams(
            dimension_semantics=("parallel", "parallel"),
            vmem_limit_bytes=vmem_limit),
    )(x_flat, edge_mask, w1g, b1c, w2m, b2c)

    out = out_flat.reshape(N, Cout, H, W)
    if stride > 1:
        # conv2 is 1x1 and BN/ReLU/LogQuant are per-pixel, so computing at stride 1
        # and subsampling the final output is mathematically exact.
        # TODO(synk): decimate h before conv2 inside the kernel when stride > 1 so the
        #             discarded pixels' conv2 / epilogue / HBM writeback are skipped.
        out = out[:, :, ::stride, ::stride]
    return out


if __name__ == "__main__":
    key = jax.random.PRNGKey(0)
    kx, kp = jax.random.split(key)

    in_planes, out_planes = 4, 8
    x = jax.random.normal(kx, (2, in_planes, 16, 16), jnp.float32)   # NCHW like PyTorch
    params = init_qblock_params(kp, in_planes, out_planes)

    out = qblock_forward(x, params, w_bits=W_BITS, a_bits=A_BITS, stride=1)
    out = jax.block_until_ready(out)

    assert out.shape == (2, out_planes, 16, 16)
    outf = out.astype(jnp.float32)
    assert bool(jnp.all(jnp.isfinite(outf)))
    # LogQuant(unsigned) invariants: outputs are 0 or powers of two in [2^-15, 1]
    pow2_ok = jnp.all(jnp.where(
        outf > 0,
        jnp.exp2(jnp.round(jnp.log2(jnp.maximum(outf, 1e-30)))) == outf,
        outf == 0.0))
    assert bool(pow2_ok)
    assert bool(jnp.all(outf <= 1.0))
    print("KERNEL_OK")
</pallas_src>

<mosaic_0001>
module attributes {stable_mosaic.version = 11 : i64} {
  func.func @_qblock_fused_kernel(%arg0: i32, %arg1: i32, %arg2: memref<1x4x256xf32, #tpu.memory_space<vmem>>, %arg3: memref<2x256xf32, #tpu.memory_space<vmem>>, %arg4: memref<3x4x12xbf16, #tpu.memory_space<vmem>>, %arg5: memref<4x1xf32, #tpu.memory_space<vmem>>, %arg6: memref<8x4xbf16, #tpu.memory_space<vmem>>, %arg7: memref<8x1xf32, #tpu.memory_space<vmem>>, %arg8: memref<1x8x256xbf16, #tpu.memory_space<vmem>>, %arg9: memref<4x290xbf16, #tpu.memory_space<vmem>>, %arg10: memref<12x256xbf16, #tpu.memory_space<vmem>>) attributes {dimension_semantics = [#tpu.dimension_semantics<parallel>, #tpu.dimension_semantics<parallel>], iteration_bounds = array<i64: 2, 1>, scalar_prefetch = 0 : i64, scratch_operands = 2 : i64, tpu.core_type = #tpu.core_type<tc>, window_params = [{transform_indices = @transform_0, window_bounds = array<i64: 1, 4, 256>}, {pipeline_mode = #tpu.pipeline_mode<synchronous>, transform_indices = @transform_1, window_bounds = array<i64: 2, 256>}, {pipeline_mode = #tpu.pipeline_mode<synchronous>, transform_indices = @transform_2, window_bounds = array<i64: 3, 4, 12>}, {pipeline_mode = #tpu.pipeline_mode<synchronous>, transform_indices = @transform_3, window_bounds = array<i64: 4, 1>}, {pipeline_mode = #tpu.pipeline_mode<synchronous>, transform_indices = @transform_4, window_bounds = array<i64: 8, 4>}, {pipeline_mode = #tpu.pipeline_mode<synchronous>, transform_indices = @transform_5, window_bounds = array<i64: 8, 1>}, {transform_indices = @transform_6, window_bounds = array<i64: 1, 8, 256>}]} {
    %cst = arith.constant 0.000000e+00 : bf16
    %0 = vector.broadcast %cst : bf16 to vector<4x17xbf16>
    %c0 = arith.constant 0 : index
    %c0_0 = arith.constant 0 : index
    %1 = vector.load %arg9[%c0, %c0_0] : memref<4x290xbf16, #tpu.memory_space<vmem>>, vector<4x17xbf16>
    tpu.vector_store %arg9[%c0, %c0_0], %0 {strides = array<i32>} : memref<4x290xbf16, #tpu.memory_space<vmem>>, vector<4x17xbf16>,
    %cst_1 = arith.constant 0.000000e+00 : bf16
    %2 = vector.broadcast %cst_1 : bf16 to vector<4x17xbf16>
    %c0_2 = arith.constant 0 : index
    %c273 = arith.constant 273 : index
    %3 = vector.load %arg9[%c0_2, %c273] : memref<4x290xbf16, #tpu.memory_space<vmem>>, vector<4x17xbf16>
    tpu.vector_store %arg9[%c0_2, %c273], %2 {strides = array<i32>} : memref<4x290xbf16, #tpu.memory_space<vmem>>, vector<4x17xbf16>,
    %c0_3 = arith.constant 0 : index
    %c0_4 = arith.constant 0 : index
    %c0_5 = arith.constant 0 : index
    %4 = vector.load %arg2[%c0_3, %c0_4, %c0_5] : memref<1x4x256xf32, #tpu.memory_space<vmem>>, vector<1x4x256xf32>
    %5 = vector.shape_cast %4 : vector<1x4x256xf32> to vector<4x256xf32>
    %6 = arith.truncf %5 : vector<4x256xf32> to vector<4x256xbf16>
    %c0_6 = arith.constant 0 : index
    %c17 = arith.constant 17 : index
    %7 = vector.load %arg9[%c0_6, %c17] : memref<4x290xbf16, #tpu.memory_space<vmem>>, vector<4x256xbf16>
    tpu.vector_store %arg9[%c0_6, %c17], %6 {strides = array<i32>} : memref<4x290xbf16, #tpu.memory_space<vmem>>, vector<4x256xbf16>,
    %c0_7 = arith.constant 0 : index
    %c0_8 = arith.constant 0 : index
    %8 = vector.load %arg9[%c0_7, %c0_8] : memref<4x290xbf16, #tpu.memory_space<vmem>>, vector<4x256xbf16>
    %c0_9 = arith.constant 0 : index
    %c0_10 = arith.constant 0 : index
    %9 = vector.load %arg10[%c0_9, %c0_10] : memref<12x256xbf16, #tpu.memory_space<vmem>>, vector<4x256xbf16>
    tpu.vector_store %arg10[%c0_9, %c0_10], %8 {strides = array<i32>} : memref<12x256xbf16, #tpu.memory_space<vmem>>, vector<4x256xbf16>,
    %c0_11 = arith.constant 0 : index
    %c16 = arith.constant 16 : index
    %10 = vector.load %arg9[%c0_11, %c16] : memref<4x290xbf16, #tpu.memory_space<vmem>>, vector<4x256xbf16>
    %c4 = arith.constant 4 : index
    %c0_12 = arith.constant 0 : index
    %11 = vector.load %arg10[%c4, %c0_12] : memref<12x256xbf16, #tpu.memory_space<vmem>>, vector<4x256xbf16>
    tpu.vector_store %arg10[%c4, %c0_12], %10 {strides = array<i32>} : memref<12x256xbf16, #tpu.memory_space<vmem>>, vector<4x256xbf16>,
    %c0_13 = arith.constant 0 : index
    %c32 = arith.constant 32 : index
    %12 = vector.load %arg9[%c0_13, %c32] : memref<4x290xbf16, #tpu.memory_space<vmem>>, vector<4x256xbf16>
    %c8 = arith.constant 8 : index
    %c0_14 = arith.constant 0 : index
    %13 = vector.load %arg10[%c8, %c0_14] : memref<12x256xbf16, #tpu.memory_space<vmem>>, vector<4x256xbf16>
    tpu.vector_store %arg10[%c8, %c0_14], %12 {strides = array<i32>} : memref<12x256xbf16, #tpu.memory_space<vmem>>, vector<4x256xbf16>,
    %c0_15 = arith.constant 0 : index
    %c0_16 = arith.constant 0 : index
    %c0_17 = arith.constant 0 : index
    %14 = vector.load %arg4[%c0_15, %c0_16, %c0_17] : memref<3x4x12xbf16, #tpu.memory_space<vmem>>, vector<1x4x12xbf16>
    %15 = vector.shape_cast %14 : vector<1x4x12xbf16> to vector<4x12xbf16>
    %c0_18 = arith.constant 0 : index
    %c0_19 = arith.constant 0 : index
    %16 = vector.load %arg10[%c0_18, %c0_19] : memref<12x256xbf16, #tpu.memory_space<vmem>>, vector<12x256xbf16>
    %cst_20 = arith.constant dense<0.000000e+00> : vector<4x256xf32>
    %17 = tpu.matmul %15, %16, %cst_20 {dimension_numbers = #tpu.dot_dimension_numbers<[1], [0], [0], [1], [0, 0, 1, 1], [], []>} : vector<4x12xbf16>, vector<12x256xbf16>, vector<4x256xf32> -> vector<4x256xf32>
    %c0_21 = arith.constant 0 : index
    %c0_22 = arith.constant 0 : index
    %18 = vector.load %arg3[%c0_21, %c0_22] : memref<2x256xf32, #tpu.memory_space<vmem>>, vector<1x256xf32>
    %19 = vector.broadcast %18 : vector<1x256xf32> to vector<4x256xf32>
    %20 = arith.mulf %17, %19 : vector<4x256xf32>
    %c0_23 = arith.constant 0 : index
    %c1 = arith.constant 1 : index
    %21 = vector.load %arg9[%c0_23, %c1] : memref<4x290xbf16, #tpu.memory_space<vmem>>, vector<4x256xbf16>
    %c0_24 = arith.constant 0 : index
    %c0_25 = arith.constant 0 : index
    %22 = vector.load %arg10[%c0_24, %c0_25] : memref<12x256xbf16, #tpu.memory_space<vmem>>, vector<4x256xbf16>
    tpu.vector_store %arg10[%c0_24, %c0_25], %21 {strides = array<i32>} : memref<12x256xbf16, #tpu.memory_space<vmem>>, vector<4x256xbf16>,
    %c0_26 = arith.constant 0 : index
    %c17_27 = arith.constant 17 : index
    %23 = vector.load %arg9[%c0_26, %c17_27] : memref<4x290xbf16, #tpu.memory_space<vmem>>, vector<4x256xbf16>
    %c4_28 = arith.constant 4 : index
    %c0_29 = arith.constant 0 : index
    %24 = vector.load %arg10[%c4_28, %c0_29] : memref<12x256xbf16, #tpu.memory_space<vmem>>, vector<4x256xbf16>
    tpu.vector_store %arg10[%c4_28, %c0_29], %23 {strides = array<i32>} : memref<12x256xbf16, #tpu.memory_space<vmem>>, vector<4x256xbf16>,
    %c0_30 = arith.constant 0 : index
    %c33 = arith.constant 33 : index
    %25 = vector.load %arg9[%c0_30, %c33] : memref<4x290xbf16, #tpu.memory_space<vmem>>, vector<4x256xbf16>
    %c8_31 = arith.constant 8 : index
    %c0_32 = arith.constant 0 : index
    %26 = vector.load %arg10[%c8_31, %c0_32] : memref<12x256xbf16, #tpu.memory_space<vmem>>, vector<4x256xbf16>
    tpu.vector_store %arg10[%c8_31, %c0_32], %25 {strides = array<i32>} : memref<12x256xbf16, #tpu.memory_space<vmem>>, vector<4x256xbf16>,
    %c1_33 = arith.constant 1 : index
    %c0_34 = arith.constant 0 : index
    %c0_35 = arith.constant 0 : index
    %27 = vector.load %arg4[%c1_33, %c0_34, %c0_35] : memref<3x4x12xbf16, #tpu.memory_space<vmem>>, vector<1x4x12xbf16>
    %28 = vector.shape_cast %27 : vector<1x4x12xbf16> to vector<4x12xbf16>
    %c0_36 = arith.constant 0 : index
    %c0_37 = arith.constant 0 : index
    %29 = vector.load %arg10[%c0_36, %c0_37] : memref<12x256xbf16, #tpu.memory_space<vmem>>, vector<12x256xbf16>
    %cst_38 = arith.constant dense<0.000000e+00> : vector<4x256xf32>
    %30 = tpu.matmul %28, %29, %cst_38 {dimension_numbers = #tpu.dot_dimension_numbers<[1], [0], [0], [1], [0, 0, 1, 1], [], []>} : vector<4x12xbf16>, vector<12x256xbf16>, vector<4x256xf32> -> vector<4x256xf32>
    %31 = arith.addf %20, %30 : vector<4x256xf32>
    %c0_39 = arith.constant 0 : index
    %c2 = arith.constant 2 : index
    %32 = vector.load %arg9[%c0_39, %c2] : memref<4x290xbf16, #tpu.memory_space<vmem>>, vector<4x256xbf16>
    %c0_40 = arith.constant 0 : index
    %c0_41 = arith.constant 0 : index
    %33 = vector.load %arg10[%c0_40, %c0_41] : memref<12x256xbf16, #tpu.memory_space<vmem>>, vector<4x256xbf16>
    tpu.vector_store %arg10[%c0_40, %c0_41], %32 {strides = array<i32>} : memref<12x256xbf16, #tpu.memory_space<vmem>>, vector<4x256xbf16>,
    %c0_42 = arith.constant 0 : index
    %c18 = arith.constant 18 : index
    %34 = vector.load %arg9[%c0_42, %c18] : memref<4x290xbf16, #tpu.memory_space<vmem>>, vector<4x256xbf16>
    %c4_43 = arith.constant 4 : index
    %c0_44 = arith.constant 0 : index
    %35 = vector.load %arg10[%c4_43, %c0_44] : memref<12x256xbf16, #tpu.memory_space<vmem>>, vector<4x256xbf16>
    tpu.vector_store %arg10[%c4_43, %c0_44], %34 {strides = array<i32>} : memref<12x256xbf16, #tpu.memory_space<vmem>>, vector<4x256xbf16>,
    %c0_45 = arith.constant 0 : index
    %c34 = arith.constant 34 : index
    %36 = vector.load %arg9[%c0_45, %c34] : memref<4x290xbf16, #tpu.memory_space<vmem>>, vector<4x256xbf16>
    %c8_46 = arith.constant 8 : index
    %c0_47 = arith.constant 0 : index
    %37 = vector.load %arg10[%c8_46, %c0_47] : memref<12x256xbf16, #tpu.memory_space<vmem>>, vector<4x256xbf16>
    tpu.vector_store %arg10[%c8_46, %c0_47], %36 {strides = array<i32>} : memref<12x256xbf16, #tpu.memory_space<vmem>>, vector<4x256xbf16>,
    %c2_48 = arith.constant 2 : index
    %c0_49 = arith.constant 0 : index
    %c0_50 = arith.constant 0 : index
    %38 = vector.load %arg4[%c2_48, %c0_49, %c0_50] : memref<3x4x12xbf16, #tpu.memory_space<vmem>>, vector<1x4x12xbf16>
    %39 = vector.shape_cast %38 : vector<1x4x12xbf16> to vector<4x12xbf16>
    %c0_51 = arith.constant 0 : index
    %c0_52 = arith.constant 0 : index
    %40 = vector.load %arg10[%c0_51, %c0_52] : memref<12x256xbf16, #tpu.memory_space<vmem>>, vector<12x256xbf16>
    %cst_53 = arith.constant dense<0.000000e+00> : vector<4x256xf32>
    %41 = tpu.matmul %39, %40, %cst_53 {dimension_numbers = #tpu.dot_dimension_numbers<[1], [0], [0], [1], [0, 0, 1, 1], [], []>} : vector<4x12xbf16>, vector<12x256xbf16>, vector<4x256xf32> -> vector<4x256xf32>
    %c1_54 = arith.constant 1 : index
    %c0_55 = arith.constant 0 : index
    %42 = vector.load %arg3[%c1_54, %c0_55] : memref<2x256xf32, #tpu.memory_space<vmem>>, vector<1x256xf32>
    %43 = vector.broadcast %42 : vector<1x256xf32> to vector<4x256xf32>
    %44 = arith.mulf %41, %43 : vector<4x256xf32>
    %45 = arith.addf %31, %44 : vector<4x256xf32>
    %c0_56 = arith.constant 0 : index
    %c0_57 = arith.constant 0 : index
    %46 = vector.load %arg5[%c0_56, %c0_57] : memref<4x1xf32, #tpu.memory_space<vmem>>, vector<4x1xf32>
    %47 = vector.broadcast %46 : vector<4x1xf32> to vector<4x256xf32>
    %48 = arith.addf %45, %47 : vector<4x256xf32>
    %cst_58 = arith.constant 0.000000e+00 : f32
    %49 = vector.broadcast %cst_58 : f32 to vector<4x256xf32>
    %50 = arith.maximumf %48, %49 : vector<4x256xf32>
    %51 = tpu.bitcast %50 : vector<4x256xf32> -> vector<4x256xi32>
    %c4913932_i32 = arith.constant 4913932 : i32
    %52 = vector.broadcast %c4913932_i32 : i32 to vector<4x256xi32>
    %53 = arith.addi %51, %52 : vector<4x256xi32>
    %c23_i32 = arith.constant 23 : i32
    %54 = vector.broadcast %c23_i32 : i32 to vector<4x256xi32>
    %55 = arith.shrsi %53, %54 : vector<4x256xi32>
    %c127_i32 = arith.constant 127 : i32
    %56 = vector.broadcast %c127_i32 : i32 to vector<4x256xi32>
    %57 = arith.subi %55, %56 : vector<4x256xi32>
    %c-15_i32 = arith.constant -15 : i32
    %c0_i32 = arith.constant 0 : i32
    %58 = vector.broadcast %c-15_i32 : i32 to vector<4x256xi32>
    %59 = arith.maxsi %58, %57 : vector<4x256xi32>
    %60 = vector.broadcast %c0_i32 : i32 to vector<4x256xi32>
    %61 = arith.minsi %60, %59 : vector<4x256xi32>
    %c127_i32_59 = arith.constant 127 : i32
    %62 = vector.broadcast %c127_i32_59 : i32 to vector<4x256xi32>
    %63 = arith.addi %61, %62 : vector<4x256xi32>
    %c23_i32_60 = arith.constant 23 : i32
    %64 = vector.broadcast %c23_i32_60 : i32 to vector<4x256xi32>
    %65 = arith.shli %63, %64 : vector<4x256xi32>
    %66 = tpu.bitcast %65 : vector<4x256xi32> -> vector<4x256xf32>
    %cst_61 = arith.constant 0.000000e+00 : f32
    %67 = vector.broadcast %cst_61 : f32 to vector<4x256xf32>
    %68 = arith.cmpf ogt, %50, %67 : vector<4x256xf32>
    %cst_62 = arith.constant 0.000000e+00 : f32
    %69 = vector.broadcast %cst_62 : f32 to vector<4x256xf32>
    %70 = arith.select %68, %66, %69 : vector<4x256xi1>, vector<4x256xf32>
    %71 = arith.truncf %70 : vector<4x256xf32> to vector<4x256xbf16>
    %c0_63 = arith.constant 0 : index
    %c0_64 = arith.constant 0 : index
    %72 = vector.load %arg6[%c0_63, %c0_64] : memref<8x4xbf16, #tpu.memory_space<vmem>>, vector<8x4xbf16>
    %cst_65 = arith.constant dense<0.000000e+00> : vector<8x256xf32>
    %73 = tpu.matmul %72, %71, %cst_65 {dimension_numbers = #tpu.dot_dimension_numbers<[1], [0], [0], [1], [0, 0, 1, 1], [], []>} : vector<8x4xbf16>, vector<4x256xbf16>, vector<8x256xf32> -> vector<8x256xf32>
    %c0_66 = arith.constant 0 : index
    %c0_67 = arith.constant 0 : index
    %74 = vector.load %arg7[%c0_66, %c0_67] : memref<8x1xf32, #tpu.memory_space<vmem>>, vector<8x1xf32>
    %75 = vector.broadcast %74 : vector<8x1xf32> to vector<8x256xf32>
    %76 = arith.addf %73, %75 : vector<8x256xf32>
    %cst_68 = arith.constant 0.000000e+00 : f32
    %77 = vector.broadcast %cst_68 : f32 to vector<8x256xf32>
    %78 = arith.maximumf %76, %77 : vector<8x256xf32>
    %79 = tpu.bitcast %78 : vector<8x256xf32> -> vector<8x256xi32>
    %c4913932_i32_69 = arith.constant 4913932 : i32
    %80 = vector.broadcast %c4913932_i32_69 : i32 to vector<8x256xi32>
    %81 = arith.addi %79, %80 : vector<8x256xi32>
    %c23_i32_70 = arith.constant 23 : i32
    %82 = vector.broadcast %c23_i32_70 : i32 to vector<8x256xi32>
    %83 = arith.shrsi %81, %82 : vector<8x256xi32>
    %c127_i32_71 = arith.constant 127 : i32
    %84 = vector.broadcast %c127_i32_71 : i32 to vector<8x256xi32>
    %85 = arith.subi %83, %84 : vector<8x256xi32>
    %c-15_i32_72 = arith.constant -15 : i32
    %c0_i32_73 = arith.constant 0 : i32
    %86 = vector.broadcast %c-15_i32_72 : i32 to vector<8x256xi32>
    %87 = arith.maxsi %86, %85 : vector<8x256xi32>
    %88 = vector.broadcast %c0_i32_73 : i32 to vector<8x256xi32>
    %89 = arith.minsi %88, %87 : vector<8x256xi32>
    %c127_i32_74 = arith.constant 127 : i32
    %90 = vector.broadcast %c127_i32_74 : i32 to vector<8x256xi32>
    %91 = arith.addi %89, %90 : vector<8x256xi32>
    %c23_i32_75 = arith.constant 23 : i32
    %92 = vector.broadcast %c23_i32_75 : i32 to vector<8x256xi32>
    %93 = arith.shli %91, %92 : vector<8x256xi32>
    %94 = tpu.bitcast %93 : vector<8x256xi32> -> vector<8x256xf32>
    %cst_76 = arith.constant 0.000000e+00 : f32
    %95 = vector.broadcast %cst_76 : f32 to vector<8x256xf32>
    %96 = arith.cmpf ogt, %78, %95 : vector<8x256xf32>
    %cst_77 = arith.constant 0.000000e+00 : f32
    %97 = vector.broadcast %cst_77 : f32 to vector<8x256xf32>
    %98 = arith.select %96, %94, %97 : vector<8x256xi1>, vector<8x256xf32>
    %99 = arith.truncf %98 : vector<8x256xf32> to vector<8x256xbf16>
    %100 = vector.shape_cast %99 : vector<8x256xbf16> to vector<1x8x256xbf16>
    %c0_78 = arith.constant 0 : index
    %c0_79 = arith.constant 0 : index
    %c0_80 = arith.constant 0 : index
    %101 = vector.load %arg8[%c0_78, %c0_79, %c0_80] : memref<1x8x256xbf16, #tpu.memory_space<vmem>>, vector<1x8x256xbf16>
    tpu.vector_store %arg8[%c0_78, %c0_79, %c0_80], %100 {strides = array<i32>} : memref<1x8x256xbf16, #tpu.memory_space<vmem>>, vector<1x8x256xbf16>,
    return
  }
  func.func @transform_0(%arg0: i32, %arg1: i32) -> (i32, i32, i32) {
    %c0_i32 = arith.constant 0 : i32
    %c0_i32_0 = arith.constant 0 : i32
    %c0_i32_1 = arith.constant 0 : i32
    return %arg0, %c0_i32, %c0_i32_0 : i32, i32, i32
  }
  func.func @transform_1(%arg0: i32, %arg1: i32) -> (i32, i32) {
    %c0_i32 = arith.constant 0 : i32
    %c0_i32_0 = arith.constant 0 : i32
    %c0_i32_1 = arith.constant 0 : i32
    return %c0_i32, %c0_i32_0 : i32, i32
  }
  func.func @transform_2(%arg0: i32, %arg1: i32) -> (i32, i32, i32) {
    %c0_i32 = arith.constant 0 : i32
    %c0_i32_0 = arith.constant 0 : i32
    %c0_i32_1 = arith.constant 0 : i32
    %c0_i32_2 = arith.constant 0 : i32
    return %c0_i32, %c0_i32_0, %c0_i32_1 : i32, i32, i32
  }
  func.func @transform_3(%arg0: i32, %arg1: i32) -> (i32, i32) {
    %c0_i32 = arith.constant 0 : i32
    %c0_i32_0 = arith.constant 0 : i32
    %c0_i32_1 = arith.constant 0 : i32
    return %c0_i32, %c0_i32_0 : i32, i32
  }
  func.func @transform_4(%arg0: i32, %arg1: i32) -> (i32, i32) {
    %c0_i32 = arith.constant 0 : i32
    %c0_i32_0 = arith.constant 0 : i32
    %c0_i32_1 = arith.constant 0 : i32
    return %c0_i32, %c0_i32_0 : i32, i32
  }
  func.func @transform_5(%arg0: i32, %arg1: i32) -> (i32, i32) {
    %c0_i32 = arith.constant 0 : i32
    %c0_i32_0 = arith.constant 0 : i32
    %c0_i32_1 = arith.constant 0 : i32
    return %c0_i32, %c0_i32_0 : i32, i32
  }
  func.func @transform_6(%arg0: i32, %arg1: i32) -> (i32, i32, i32) {
    %c0_i32 = arith.constant 0 : i32
    %c0_i32_0 = arith.constant 0 : i32
    return %arg0, %c0_i32, %arg1 : i32, i32, i32
  }
}

</mosaic_0001>

<llo_original>
// kernel: tpu_custom_call.1
$region0: #{tpu_custom_call.1}
  #allocation0 [shape = 'u32[]', space=smem, size = 0x4, offset = 0x4, fixed_abs, tag = 'smem constant byte address 0x4 - core index']
  #allocation1 [shape = 'u32[72,128]{1,0:T(1,128)}', space=vmem, size = 0x9000, scoped, tag = 'internal scratch']
  #allocation2 [shape = 'bf16[4,290]{1,0:T(4,128)(2,1)}', space=vmem, size = 0xc00, scoped, tag = 'scratch operand']
  #allocation3 [shape = 'bf16[12,256]{1,0:T(8,128)(2,1)}', space=vmem, size = 0x2000, scoped, tag = 'scratch operand']
  %s0 = inlined_call_operand.hbm [shape: f32[2,4,256], index: 0, kind: input, shape index: {}]
  %s1 = inlined_call_operand.vmem [shape: f32[2,256], index: 1, kind: input, shape index: {}]
  %s2 = inlined_call_operand.vmem [shape: bf16[3,4,12], index: 2, kind: input, shape index: {}]
  %s3 = inlined_call_operand.vmem [shape: f32[4,1], index: 3, kind: input, shape index: {}]
  %s4 = inlined_call_operand.vmem [shape: bf16[8,4], index: 4, kind: input, shape index: {}]
  %s5 = inlined_call_operand.vmem [shape: f32[8,1], index: 5, kind: input, shape index: {}]
  %s6 = inlined_call_operand.hbm [shape: bf16[2,8,256], index: 6, kind: output, shape index: {}]
  %s7 = sld [smem:[#allocation0]]
  $region61: #{tpu_custom_call.1} parent=0
    _
  %s9 = ssub.s32 1, %s7
  %s10 = scalar_select 0, %s9, %s7
  $region1: #{tpu_custom_call.1} parent=0
    #allocation4 [shape = 'u8[8192]{0}', space=vmem, size = 0x2000, scoped, tag = 'input window, operand 0']
    #allocation5 [shape = 's32[2]{0}', space=sflag, size = 0x8, scoped, tag = 'scoped memory for tpu_custom_call.1']
    #allocation6 [shape = 's32[2]{0}', space=sflag, size = 0x8, scoped, tag = 'scoped memory for tpu_custom_call.1']
    #allocation7 [shape = 'u8[8192]{0}', space=vmem, size = 0x2000, scoped, tag = 'output window, operand 0']
    %11 = vsyncpa [#allocation5], 0
    %s12 = scalar_lea.sflag [#allocation5], 1
    %13 = vsyncpa %s12, 0
    %14 = vsyncpa [#allocation6], 0
    %s15 = scalar_lea.sflag [#allocation6], 1
    %16 = vsyncpa %s15, 0
    loop: start=0, step=1, limit=4
    $region2: #{tpu_custom_call.1} parent=1 // loop_pre_header
      _
    $region3: #{tpu_custom_call.1} parent=1 // loop_header
      %s18 = sphi 0, %s22
      %p19 = scmp.ge.s32.totalorder %s18, 4
      %s25 = sphi 0, %s37
      %s26 = sphi 0, %s33
      %s27 = sphi 0, %s25
      %s28 = sphi 0, %s26
      %s29 = sphi 0, %s27
      %s30 = sphi 0, %s28
      %s40 = sphi 0, %s42
      %s43 = sphi 0, %s40
      %s44 = sphi 0, %s43
      %s60 = sphi 0, %s44
      %s64 = sphi 0, %s64
      %s66 = sphi 0, %s64
      %s67 = sphi 0, %s66
      %s81 = sphi 0, %s67
      %s85 = sphi 0, %s85
      %s87 = sphi 0, %s85
      %s88 = sphi 0, %s87
      %s102 = sphi 0, %s88
      %s106 = sphi 0, %s106
      %s108 = sphi 0, %s106
      %s109 = sphi 0, %s108
      %s123 = sphi 0, %s109
      %s127 = sphi 0, %s127
      %s129 = sphi 0, %s127
      %s130 = sphi 0, %s129
      %s144 = sphi 0, %s130
      %s148 = sphi 0, %s148
      %s150 = sphi 0, %s148
      %s151 = sphi 0, %s150
      %s165 = sphi 0, %s151
      %s173 = sphi 0, %s175
      %s176 = sphi 0, %s173
      %s177 = sphi 0, %s176
      %s193 = sphi 0, %s177
    $region4: #{tpu_custom_call.1} parent=1 // loop_header_branch
      %21 = sbr.rel (%p19) target = $region8
    $region5: #{tpu_custom_call.1} parent=1 // loop_body
      %s23 = ssub.s32 %s18, 1
      %s24 = ssub.s32 %s18, 2
      %s31 = sadd.s32 1, %s26
      %p32 = scmp.ge.s32.totalorder %s31, 1
      %s33 = scalar_select %p32, 0, %s31
      %s34 = sadd.s32 1, %s25
      %s35 = scalar_select %p32, %s34, %s25
      %p36 = scmp.ge.s32.totalorder %s35, 2
      %s37 = scalar_select %p36, 0, %s35
      %s38 = ssub.s32 %s25, %s37
      %p39 = scmp.eq.s32.totalorder %s38, 0
      %s41 = sadd.s32 %s40, 1
      %s42 = scalar_select %p39, %s40, %s41
      %p45 = pneg %p39
      %p46 = scmp.eq.s32.totalorder %s18, 1
      %p47 = por %p45, %p46
      %p48 = scmp.ne.s32.totalorder %s40, %s43
      %p49 = scmp.eq.s32.totalorder %s18, 0
      %p50 = por %p48, %p49
      %p51 = scmp.ne.s32.totalorder %s40, %s43
      %p52 = scmp.eq.s32.totalorder %s23, 1
      %p53 = por %p51, %p52
      %p54 = scmp.ne.s32.totalorder %s43, %s44
      %p55 = scmp.eq.s32.totalorder %s23, 0
      %p56 = por %p54, %p55
      %p57 = scmp.ne.s32.totalorder %s43, %s44
      %p58 = scmp.eq.s32.totalorder %s24, 1
      %p59 = por %p57, %p58
      %p61 = scmp.ne.s32.totalorder %s44, %s60
      %p62 = scmp.eq.s32.totalorder %s24, 0
      %p63 = por %p61, %p62
      %s65 = sadd.s32 %s64, 1
      %p68 = scmp.eq.s32.totalorder %s18, 1
      %p69 = scmp.ne.s32.totalorder %s64, %s66
      %p70 = scmp.eq.s32.totalorder %s18, 0
      %p71 = por %p69, %p70
      %p72 = scmp.ne.s32.totalorder %s64, %s66
      %p73 = scmp.eq.s32.totalorder %s23, 1
      %p74 = por %p72, %p73
      %p75 = scmp.ne.s32.totalorder %s66, %s67
      %p76 = scmp.eq.s32.totalorder %s23, 0
      %p77 = por %p75, %p76
      %p78 = scmp.ne.s32.totalorder %s66, %s67
      %p79 = scmp.eq.s32.totalorder %s24, 1
      %p80 = por %p78, %p79
      %p82 = scmp.ne.s32.totalorder %s67, %s81
      %p83 = scmp.eq.s32.totalorder %s24, 0
      %p84 = por %p82, %p83
      %s86 = sadd.s32 %s85, 1
      %p89 = scmp.eq.s32.totalorder %s18, 1
      %p90 = scmp.ne.s32.totalorder %s85, %s87
      %p91 = scmp.eq.s32.totalorder %s18, 0
      %p92 = por %p90, %p91
      %p93 = scmp.ne.s32.totalorder %s85, %s87
      %p94 = scmp.eq.s32.totalorder %s23, 1
      %p95 = por %p93, %p94
      %p96 = scmp.ne.s32.totalorder %s87, %s88
      %p97 = scmp.eq.s32.totalorder %s23, 0
      %p98 = por %p96, %p97
      %p99 = scmp.ne.s32.totalorder %s87, %s88
      %p100 = scmp.eq.s32.totalorder %s24, 1
      %p101 = por %p99, %p100
      %p103 = scmp.ne.s32.totalorder %s88, %s102
      %p104 = scmp.eq.s32.totalorder %s24, 0
      %p105 = por %p103, %p104
      %s107 = sadd.s32 %s106, 1
      %p110 = scmp.eq.s32.totalorder %s18, 1
      %p111 = scmp.ne.s32.totalorder %s106, %s108
      %p112 = scmp.eq.s32.totalorder %s18, 0
      %p113 = por %p111, %p112
      %p114 = scmp.ne.s32.totalorder %s106, %s108
      %p115 = scmp.eq.s32.totalorder %s23, 1
      %p116 = por %p114, %p115
      %p117 = scmp.ne.s32.totalorder %s108, %s109
      %p118 = scmp.eq.s32.totalorder %s23, 0
      %p119 = por %p117, %p118
      %p120 = scmp.ne.s32.totalorder %s108, %s109
      %p121 = scmp.eq.s32.totalorder %s24, 1
      %p122 = por %p120, %p121
      %p124 = scmp.ne.s32.totalorder %s109, %s123
      %p125 = scmp.eq.s32.totalorder %s24, 0
      %p126 = por %p124, %p125
      %s128 = sadd.s32 %s127, 1
      %p131 = scmp.eq.s32.totalorder %s18, 1
      %p132 = scmp.ne.s32.totalorder %s127, %s129
      %p133 = scmp.eq.s32.totalorder %s18, 0
      %p134 = por %p132, %p133
      %p135 = scmp.ne.s32.totalorder %s127, %s129
      %p136 = scmp.eq.s32.totalorder %s23, 1
      %p137 = por %p135, %p136
      %p138 = scmp.ne.s32.totalorder %s129, %s130
      %p139 = scmp.eq.s32.totalorder %s23, 0
      %p140 = por %p138, %p139
      %p141 = scmp.ne.s32.totalorder %s129, %s130
      %p142 = scmp.eq.s32.totalorder %s24, 1
      %p143 = por %p141, %p142
      %p145 = scmp.ne.s32.totalorder %s130, %s144
      %p146 = scmp.eq.s32.totalorder %s24, 0
      %p147 = por %p145, %p146
      %s149 = sadd.s32 %s148, 1
      %p152 = scmp.eq.s32.totalorder %s18, 1
      %p153 = scmp.ne.s32.totalorder %s148, %s150
      %p154 = scmp.eq.s32.totalorder %s18, 0
      %p155 = por %p153, %p154
      %p156 = scmp.ne.s32.totalorder %s148, %s150
      %p157 = scmp.eq.s32.totalorder %s23, 1
      %p158 = por %p156, %p157
      %p159 = scmp.ne.s32.totalorder %s150, %s151
      %p160 = scmp.eq.s32.totalorder %s23, 0
      %p161 = por %p159, %p160
      %p162 = scmp.ne.s32.totalorder %s150, %s151
      %p163 = scmp.eq.s32.totalorder %s24, 1
      %p164 = por %p162, %p163
      %p166 = scmp.ne.s32.totalorder %s151, %s165
      %p167 = scmp.eq.s32.totalorder %s24, 0
      %p168 = por %p166, %p167
      %s169 = ssub.s32 %s25, %s37
      %s170 = ssub.s32 %s26, %s33
      %s171 = sor.u32 %s169, %s170
      %p172 = scmp.eq.s32.totalorder %s171, 0
      %s174 = sadd.s32 %s173, 1
      %s175 = scalar_select %p172, %s173, %s174
      %p178 = pneg %p172
      %p179 = scmp.eq.s32.totalorder %s18, 1
      %p180 = por %p178, %p179
      %p181 = scmp.ne.s32.totalorder %s173, %s176
      %p182 = scmp.eq.s32.totalorder %s18, 0
      %p183 = por %p181, %p182
      %p184 = scmp.ne.s32.totalorder %s173, %s176
      %p185 = scmp.eq.s32.totalorder %s23, 1
      %p186 = por %p184, %p185
      %p187 = scmp.ne.s32.totalorder %s176, %s177
      %p188 = scmp.eq.s32.totalorder %s23, 0
      %p189 = por %p187, %p188
      %p190 = scmp.ne.s32.totalorder %s176, %s177
      %p191 = scmp.eq.s32.totalorder %s24, 1
      %p192 = por %p190, %p191
      %p194 = scmp.ne.s32.totalorder %s177, %s193
      %p195 = scmp.eq.s32.totalorder %s24, 0
      %p196 = por %p194, %p195
      %p197 = scmp.le.s32.totalorder 1, %s18
      %p198 = scmp.lt.s32.totalorder %s18, 3
      %p199 = pnand %p197, %p198
      %p200 = pneg %p199
      // Predicated region
      $region9: #{tpu_custom_call.1} parent=5 // pred_check
        _
      $region10: #{tpu_custom_call.1} parent=5 // pred_check_branch
        %202 = sbr.rel (%p199) target = $region12
      $region11: #{tpu_custom_call.1} parent=5 // pred_region
        %s203 = ssub.s32 %s18, 1
        // Predicated region
        $region13: #{tpu_custom_call.1} parent=11 // pred_check
          %p204 = pneg %p77
        $region14: #{tpu_custom_call.1} parent=11 // pred_check_branch
          %206 = sbr.rel (%p204) target = $region16
        $region15: #{tpu_custom_call.1} parent=11 // pred_region
          _
        $region16: #{tpu_custom_call.1} parent=11 // pred_fallthru
          _
        // Predicated region
        $region17: #{tpu_custom_call.1} parent=11 // pred_check
          %p207 = pneg %p98
        $region18: #{tpu_custom_call.1} parent=11 // pred_check_branch
          %209 = sbr.rel (%p207) target = $region20
        $region19: #{tpu_custom_call.1} parent=11 // pred_region
          _
        $region20: #{tpu_custom_call.1} parent=11 // pred_fallthru
          _
        // Predicated region
        $region21: #{tpu_custom_call.1} parent=11 // pred_check
          %p210 = pneg %p119
        $region22: #{tpu_custom_call.1} parent=11 // pred_check_branch
          %212 = sbr.rel (%p210) target = $region24
        $region23: #{tpu_custom_call.1} parent=11 // pred_region
          _
        $region24: #{tpu_custom_call.1} parent=11 // pred_fallthru
          _
        // Predicated region
        $region25: #{tpu_custom_call.1} parent=11 // pred_check
          %p213 = pneg %p140
        $region26: #{tpu_custom_call.1} parent=11 // pred_check_branch
          %215 = sbr.rel (%p213) target = $region28
        $region27: #{tpu_custom_call.1} parent=11 // pred_region
          _
        $region28: #{tpu_custom_call.1} parent=11 // pred_fallthru
          _
        // Predicated region
        $region29: #{tpu_custom_call.1} parent=11 // pred_check
          %p216 = pneg %p161
        $region30: #{tpu_custom_call.1} parent=11 // pred_check_branch
          %218 = sbr.rel (%p216) target = $region32
        $region31: #{tpu_custom_call.1} parent=11 // pred_region
          _
        $region32: #{tpu_custom_call.1} parent=11 // pred_fallthru
          _
      $region12: #{tpu_custom_call.1} parent=5 // pred_fallthru
        _
      %p219 = scmp.lt.s32.totalorder %s18, 2
      // Predicated region
      $region33: #{tpu_custom_call.1} parent=5 // pred_check
        %p220 = pneg %p219
      $region34: #{tpu_custom_call.1} parent=5 // pred_check_branch
        %222 = sbr.rel (%p220) target = $region36
      $region35: #{tpu_custom_call.1} parent=5 // pred_region
        // Predicated region
        $region37: #{tpu_custom_call.1} parent=35 // pred_check
          %p223 = pneg %p50
        $region38: #{tpu_custom_call.1} parent=35 // pred_check_branch
          %225 = sbr.rel (%p223) target = $region40
        $region39: #{tpu_custom_call.1} parent=35 // pred_region
          %s226 = sand.u32 %s40, 1
          %s227 = scalar_lea.sflag [#allocation5], %s226
          %s228 = sand.u32 %s40, 1
          %s229 = smul.addr %s228, 8
          %s230 = scalar_lea.vmem [#allocation4], %s229
          %232 = vsyncadd %s227, 0
          %s233 = smul.addr %s25, 2
          %s234 = smul.addr %s233, 4
          %s235 = scalar_lea.hbm %s0, %s234
          %s237 = sshll.u32 %s235, 4
          %s238 = int_to_ptr.hbm [resolvable:$true] %s237
          %s239 = sshll.u32 %s230, 4
          %s240 = int_to_ptr.vmem [resolvable:$true] %s239
          %242 = dma.hbm_to_vmem [thread:$0]  %s238, 128, %s240, %s227
        $region40: #{tpu_custom_call.1} parent=35 // pred_fallthru
          _
      $region36: #{tpu_custom_call.1} parent=5 // pred_fallthru
        _
      %p243 = scmp.le.s32.totalorder 1, %s18
      %p244 = scmp.lt.s32.totalorder %s18, 3
      %p245 = pnand %p243, %p244
      %p246 = pneg %p245
      // Predicated region
      $region41: #{tpu_custom_call.1} parent=5 // pred_check
        _
      $region42: #{tpu_custom_call.1} parent=5 // pred_check_branch
        %248 = sbr.rel (%p245) target = $region44
      $region43: #{tpu_custom_call.1} parent=5 // pred_region
        %s249 = ssub.s32 %s18, 1
        %s250 = sand.u32 %s43, 1
        %s251 = scalar_lea.sflag [#allocation5], %s250
        %s252 = sand.u32 %s43, 1
        %s253 = smul.addr %s252, 8
        %s254 = scalar_lea.vmem [#allocation4], %s253
        // Predicated region
        $region45: #{tpu_custom_call.1} parent=43 // pred_check
          %p255 = pneg %p56
        $region46: #{tpu_custom_call.1} parent=43 // pred_check_branch
          %257 = sbr.rel (%p255) target = $region48
        $region47: #{tpu_custom_call.1} parent=43 // pred_region
          %259 = dma.done %s251, 128
        $region48: #{tpu_custom_call.1} parent=43 // pred_fallthru
          _
        %s260 = sand.u32 %s43, 1
        %s261 = scalar_lea.sflag [#allocation5], %s260
        %s262 = sand.u32 %s43, 1
        %s263 = smul.addr %s262, 8
        %s264 = scalar_lea.vmem [#allocation4], %s263
        %p265 = pneg %p56
        %p266 = pneg %p53
        %p267 = pneg %p77
        %p268 = pneg %p74
        %p269 = pneg %p98
        %p270 = pneg %p95
        %p271 = pneg %p119
        %p272 = pneg %p116
        %p273 = pneg %p140
        %p274 = pneg %p137
        %p275 = pneg %p161
        %p276 = pneg %p158
        %p277 = pneg %p189
        %p278 = pneg %p186
        %s279 = sand.u32 %s176, 1
        %s280 = scalar_lea.sflag [#allocation6], %s279
        %s281 = sand.u32 %s176, 1
        %s282 = smul.addr %s281, 8
        %s283 = scalar_lea.vmem [#allocation7], %s282
        %s284 = smul.u32 2, %s28
        %vm286 = vcmask 132096
        %287 = vst.msk [vmem:[#allocation2] sm:$0x3] %vm286, 0
        %vm288 = vcmask 271496
        %289 = vst.msk [vmem:[#allocation2 + $0x4] sm:$0x3] %vm288, 0
        %v290 = vld [vmem:[%s254] sm:$0xff]
        %292 = vst [vmem:[#allocation1] ss:$2 sm:$0xff] %v290
        %v293 = vld.sshfl [vmem:[#allocation1] sm:$0xff pattern:$0x75316420]
        %v294 = vld.sshfl [vmem:[#allocation1 + $0x8] sm:$0xff pattern:$0x75316420]
        %v297 = vpack.c.bf16 %v294, %v293
        %v299 = vrot.slane %v297, 2
        %vm300 = vcmask 1041408
        %v303 = vsel %vm300, %v297, %v299
        %305 = vrot.lane.b32.xlu0 %v303, 17
        %v306 = vpop.permute.xlu0 %305
        %v307 = vrot.slane %v306, 6
        %vm308 = vcmask 138240
        %v309 = vsel %vm308, %v307, %v306
        %vm311 = vcmask 1041544
        %vm312 = vcmask 1043458
        %vm313 = vmor %vm312, %vm311
        %vm314 = vcmask 136196
        %vm315 = vmor %vm314, %vm313
        %316 = vst.msk [vmem:[#allocation2] sm:$0x3f] %vm315, %v309
        %v317 = vld [vmem:[#allocation2] sm:$0xf]
        %319 = vst [vmem:[#allocation1] ss:$2 sm:$0xff] %v317
        %v320 = vld.sshfl [vmem:[#allocation1] sm:$0xff pattern:$0x75643120]
        %322 = vst [vmem:[#allocation3] sm:$0x33] %v320
        %v323 = vld [vmem:[#allocation2] sm:$0x3f]
        %s325 = scalar_lea.vmem [#allocation1], 1
        %326 = vst [vmem:[%s325] ss:$2 sm:$0xff] %v323
        %v327 = vld.sshfl [vmem:[#allocation1] sm:$0xff pattern:$0x75643120]
        %v329 = vld.sshfl [vmem:[#allocation1 + $0x8] sm:$0xff pattern:$0x75643120]
        %331 = vrot.lane.b32.xlu0 %v327, 112
        %v332 = vpop.permute.xlu0 %331
        %333 = vrot.lane.b32.xlu0 %v329, 112
        %v334 = vpop.permute.xlu0 %333
        %v335 = vrot.slane %v332, 4
        %v336 = vrot.slane %v334, 4
        %vm337 = vcmask 1043456
        %v338 = vsel %vm337, %v335, %v336
        %vm339 = vcmask 916480
        %v340 = vsel %vm339, %v332, %v338
        %342 = vst [vmem:[#allocation3] sm:$0xcc] %v340
        %v343 = vld [vmem:[#allocation2] sm:$0x3f]
        %345 = vst [vmem:[#allocation1] ss:$2 sm:$0xff] %v343
        %v346 = vld.sshfl [vmem:[#allocation1] sm:$0xff pattern:$0x75643120]
        %v348 = vld.sshfl [vmem:[#allocation1 + $0x8] sm:$0xff pattern:$0x75643120]
        %350 = vrot.lane.b32.xlu0 %v346, 96
        %v351 = vpop.permute.xlu0 %350
        %352 = vrot.lane.b32.xlu0 %v348, 96
        %v353 = vpop.permute.xlu0 %352
        %v354 = vrot.slane %v351, 4
        %v355 = vrot.slane %v353, 4
        %v356 = vsel %vm337, %v354, %v355
        %vm357 = vcmask 785408
        %v358 = vsel %vm357, %v351, %v356
        %360 = vst [vmem:[#allocation3 + $0x8] sm:$0x33] %v358
        %v361 = vld [vmem:[%s2] sm:$0x3]
        %v362 = vld [vmem:[#allocation3] sm:$0xff]
        %v363 = vld [vmem:[#allocation3 + $0x8] sm:$0x33]
        %v366 = vunpack.c.l.b16 %v362
        %v367 = vunpack.c.h.b16 %v362
        %v368 = vunpack.c.l.b16 %v363
        %v369 = vunpack.c.h.b16 %v363
        %v370 = vpack.c.b16 %v368, %v366
        %v371 = vpack.c.b16 %v369, %v367
        %vm372 = vcmask 97280
        %v374 = vsel %vm372, %v361, 0
        %vm376 = vcmask 1045504
        %v378 = vsel %vm376, %v370, 0
        %v381 = vsel %vm376, %v371, 0
        %383 = vmatpush.bf16.msra.mxu0 0
        %384 = vmatpush.bf16.msra.mxu0 0
        %385 = vmatpush.bf16.msra.mxu0 0
        %386 = vmatpush.bf16.msra.mxu0 0
        %387 = vmatpush.bf16.msra.mxu0 0
        %388 = vmatpush.bf16.msra.mxu0 0
        %389 = vmatpush.bf16.msra.mxu0 0
        %390 = vmatpush.bf16.msra.mxu0 %v378
        %391 = vmatmul.bf16.gmra.mxu0 %v374
        %v392 = vpop.f32.mrf.mxu0
        %v393 = vadd.f32 0.0, %v392
        %v394 = vpop.f32.mrf.mxu0
        %395 = vdwg.mxu0
        %396 = vmatpush.bf16.msra.mxu0 0
        %397 = vmatpush.bf16.msra.mxu0 0
        %398 = vmatpush.bf16.msra.mxu0 0
        %399 = vmatpush.bf16.msra.mxu0 0
        %400 = vmatpush.bf16.msra.mxu0 0
        %401 = vmatpush.bf16.msra.mxu0 0
        %402 = vmatpush.bf16.msra.mxu0 0
        %403 = vmatpush.bf16.msra.mxu0 %v381
        %404 = vmatmul.bf16.gmra.mxu0 %v374
        %v405 = vpop.f32.mrf.mxu0
        %v406 = vadd.f32 0.0, %v405
        %v407 = vpop.f32.mrf.mxu0
        %408 = vdwg.mxu0
        %v409 = vld [vmem:[%s1] ss:$2 sm:$0x3]
        %v411 = vperm.slane %v409, 0
        %v412 = vperm.slane %v409, 1
        %v415 = vmul.f32 %v393, %v411
        %v416 = vmul.f32 %v406, %v412
        %v417 = vld [vmem:[#allocation2] sm:$0x3f]
        %419 = vst [vmem:[#allocation1] ss:$2 sm:$0xff] %v417
        %v420 = vld.sshfl [vmem:[#allocation1] sm:$0xff pattern:$0x75643120]
        %v422 = vld.sshfl [vmem:[#allocation1 + $0x8] sm:$0xff pattern:$0x75643120]
        %424 = vrot.lane.b32.xlu0 %v420, 127
        %v425 = vpop.permute.xlu0 %424
        %426 = vrot.lane.b32.xlu0 %v422, 127
        %v427 = vpop.permute.xlu0 %426
        %v428 = vrot.slane %v425, 4
        %v429 = vrot.slane %v427, 4
        %v430 = vsel %vm337, %v428, %v429
        %vm431 = vcmask 1039360
        %v432 = vsel %vm431, %v425, %v430
        %434 = vst [vmem:[#allocation3] sm:$0x33] %v432
        %v435 = vld [vmem:[#allocation2] sm:$0x3f]
        %s437 = scalar_lea.vmem [#allocation1], 1
        %438 = vst [vmem:[%s437] ss:$2 sm:$0xff] %v435
        %v439 = vld.sshfl [vmem:[#allocation1] sm:$0xff pattern:$0x75643120]
        %v441 = vld.sshfl [vmem:[#allocation1 + $0x8] sm:$0xff pattern:$0x75643120]
        %443 = vrot.lane.b32.xlu0 %v439, 111
        %v444 = vpop.permute.xlu0 %443
        %445 = vrot.lane.b32.xlu0 %v441, 111
        %v446 = vpop.permute.xlu0 %445
        %v447 = vrot.slane %v444, 4
        %v448 = vrot.slane %v446, 4
        %v449 = vsel %vm337, %v447, %v448
        %vm450 = vcmask 908288
        %v451 = vsel %vm450, %v444, %v449
        %453 = vst [vmem:[#allocation3] sm:$0xcc] %v451
        %v454 = vld [vmem:[#allocation2] sm:$0x3f]
        %456 = vst [vmem:[#allocation1] ss:$2 sm:$0xff] %v454
        %v457 = vld.sshfl [vmem:[#allocation1] sm:$0xff pattern:$0x75643120]
        %v459 = vld.sshfl [vmem:[#allocation1 + $0x8] sm:$0xff pattern:$0x75643120]
        %461 = vrot.lane.b32.xlu0 %v457, 95
        %v462 = vpop.permute.xlu0 %461
        %463 = vrot.lane.b32.xlu0 %v459, 95
        %v464 = vpop.permute.xlu0 %463
        %v465 = vrot.slane %v462, 4
        %v466 = vrot.slane %v464, 4
        %v467 = vsel %vm337, %v465, %v466
        %vm468 = vcmask 777216
        %v469 = vsel %vm468, %v462, %v467
        %471 = vst [vmem:[#allocation3 + $0x8] sm:$0x33] %v469
        %s472 = scalar_lea.vmem %s2, 2
        %v473 = vld [vmem:[%s472] sm:$0x3]
        %v474 = vld [vmem:[#allocation3] sm:$0xff]
        %v475 = vld [vmem:[#allocation3 + $0x8] sm:$0x33]
        %v478 = vunpack.c.l.b16 %v474
        %v479 = vunpack.c.h.b16 %v474
        %v480 = vunpack.c.l.b16 %v475
        %v481 = vunpack.c.h.b16 %v475
        %v482 = vpack.c.b16 %v480, %v478
        %v483 = vpack.c.b16 %v481, %v479
        %v485 = vsel %vm372, %v473, 0
        %v488 = vsel %vm376, %v482, 0
        %v491 = vsel %vm376, %v483, 0
        %493 = vmatpush.bf16.msra.mxu0 0
        %494 = vmatpush.bf16.msra.mxu0 0
        %495 = vmatpush.bf16.msra.mxu0 0
        %496 = vmatpush.bf16.msra.mxu0 0
        %497 = vmatpush.bf16.msra.mxu0 0
        %498 = vmatpush.bf16.msra.mxu0 0
        %499 = vmatpush.bf16.msra.mxu0 0
        %500 = vmatpush.bf16.msra.mxu0 %v488
        %501 = vmatmul.bf16.gmra.mxu0 %v485
        %v502 = vpop.f32.mrf.mxu0
        %v503 = vadd.f32 0.0, %v502
        %v504 = vpop.f32.mrf.mxu0
        %505 = vdwg.mxu0
        %506 = vmatpush.bf16.msra.mxu0 0
        %507 = vmatpush.bf16.msra.mxu0 0
        %508 = vmatpush.bf16.msra.mxu0 0
        %509 = vmatpush.bf16.msra.mxu0 0
        %510 = vmatpush.bf16.msra.mxu0 0
        %511 = vmatpush.bf16.msra.mxu0 0
        %512 = vmatpush.bf16.msra.mxu0 0
        %513 = vmatpush.bf16.msra.mxu0 %v491
        %514 = vmatmul.bf16.gmra.mxu0 %v485
        %v515 = vpop.f32.mrf.mxu0
        %v516 = vadd.f32 0.0, %v515
        %v517 = vpop.f32.mrf.mxu0
        %518 = vdwg.mxu0
        %v519 = vadd.f32 %v415, %v503
        %v520 = vadd.f32 %v416, %v516
        %v521 = vld [vmem:[#allocation2] sm:$0x3f]
        %523 = vst [vmem:[#allocation1] ss:$2 sm:$0xff] %v521
        %v524 = vld.sshfl [vmem:[#allocation1] sm:$0xff pattern:$0x75643120]
        %v526 = vld.sshfl [vmem:[#allocation1 + $0x8] sm:$0xff pattern:$0x75643120]
        %528 = vrot.lane.b32.xlu0 %v524, 126
        %v529 = vpop.permute.xlu0 %528
        %530 = vrot.lane.b32.xlu0 %v526, 126
        %v531 = vpop.permute.xlu0 %530
        %v532 = vrot.slane %v529, 4
        %v533 = vrot.slane %v531, 4
        %v534 = vsel %vm337, %v532, %v533
        %vm535 = vcmask 1031168
        %v536 = vsel %vm535, %v529, %v534
        %538 = vst [vmem:[#allocation3] sm:$0x33] %v536
        %v539 = vld [vmem:[#allocation2] sm:$0x3f]
        %s541 = scalar_lea.vmem [#allocation1], 1
        %542 = vst [vmem:[%s541] ss:$2 sm:$0xff] %v539
        %v543 = vld.sshfl [vmem:[#allocation1] sm:$0xff pattern:$0x75643120]
        %v545 = vld.sshfl [vmem:[#allocation1 + $0x8] sm:$0xff pattern:$0x75643120]
        %547 = vrot.lane.b32.xlu0 %v543, 110
        %v548 = vpop.permute.xlu0 %547
        %549 = vrot.lane.b32.xlu0 %v545, 110
        %v550 = vpop.permute.xlu0 %549
        %v551 = vrot.slane %v548, 4
        %v552 = vrot.slane %v550, 4
        %v553 = vsel %vm337, %v551, %v552
        %vm554 = vcmask 900096
        %v555 = vsel %vm554, %v548, %v553
        %557 = vst [vmem:[#allocation3] sm:$0xcc] %v555
        %v558 = vld [vmem:[#allocation2] sm:$0x3f]
        %560 = vst [vmem:[#allocation1] ss:$2 sm:$0xff] %v558
        %v561 = vld.sshfl [vmem:[#allocation1] sm:$0xff pattern:$0x75643120]
        %v563 = vld.sshfl [vmem:[#allocation1 + $0x8] sm:$0xff pattern:$0x75643120]
        %565 = vrot.lane.b32.xlu0 %v561, 94
        %v566 = vpop.permute.xlu0 %565
        %567 = vrot.lane.b32.xlu0 %v563, 94
        %v568 = vpop.permute.xlu0 %567
        %v569 = vrot.slane %v566, 4
        %v570 = vrot.slane %v568, 4
        %v571 = vsel %vm337, %v569, %v570
        %vm572 = vcmask 769024
        %v573 = vsel %vm572, %v566, %v571
        %575 = vst [vmem:[#allocation3 + $0x8] sm:$0x33] %v573
        %s576 = scalar_lea.vmem %s2, 4
        %v577 = vld [vmem:[%s576] sm:$0x3]
        %v578 = vld [vmem:[#allocation3] sm:$0xff]
        %v579 = vld [vmem:[#allocation3 + $0x8] sm:$0x33]
        %v582 = vunpack.c.l.b16 %v578
        %v583 = vunpack.c.h.b16 %v578
        %v584 = vunpack.c.l.b16 %v579
        %v585 = vunpack.c.h.b16 %v579
        %v586 = vpack.c.b16 %v584, %v582
        %v587 = vpack.c.b16 %v585, %v583
        %v589 = vsel %vm372, %v577, 0
        %v592 = vsel %vm376, %v586, 0
        %v595 = vsel %vm376, %v587, 0
        %597 = vmatpush.bf16.msra.mxu0 0
        %598 = vmatpush.bf16.msra.mxu0 0
        %599 = vmatpush.bf16.msra.mxu0 0
        %600 = vmatpush.bf16.msra.mxu0 0
        %601 = vmatpush.bf16.msra.mxu0 0
        %602 = vmatpush.bf16.msra.mxu0 0
        %603 = vmatpush.bf16.msra.mxu0 0
        %604 = vmatpush.bf16.msra.mxu0 %v592
        %605 = vmatmul.bf16.gmra.mxu0 %v589
        %v606 = vpop.f32.mrf.mxu0
        %v607 = vadd.f32 0.0, %v606
        %v608 = vpop.f32.mrf.mxu0
        %609 = vdwg.mxu0
        %610 = vmatpush.bf16.msra.mxu0 0
        %611 = vmatpush.bf16.msra.mxu0 0
        %612 = vmatpush.bf16.msra.mxu0 0
        %613 = vmatpush.bf16.msra.mxu0 0
        %614 = vmatpush.bf16.msra.mxu0 0
        %615 = vmatpush.bf16.msra.mxu0 0
        %616 = vmatpush.bf16.msra.mxu0 0
        %617 = vmatpush.bf16.msra.mxu0 %v595
        %618 = vmatmul.bf16.gmra.mxu0 %v589
        %v619 = vpop.f32.mrf.mxu0
        %v620 = vadd.f32 0.0, %v619
        %v621 = vpop.f32.mrf.mxu0
        %622 = vdwg.mxu0
        %s623 = scalar_lea.vmem %s1, 1
        %v624 = vld [vmem:[%s623] ss:$2 sm:$0x3]
        %v626 = vperm.slane %v624, 0
        %v627 = vperm.slane %v624, 1
        %v630 = vmul.f32 %v607, %v626
        %v631 = vmul.f32 %v620, %v627
        %v632 = vadd.f32 %v519, %v630
        %v633 = vadd.f32 %v520, %v631
        %v634 = vld [vmem:[%s3] sm:$0xf]
        %636 = vset.pattern.permute.xlu0 0
        %637 = vperm.xlu0 %636, %v634
        %v638 = vpop.permute.xlu0 %637
        %v640 = vadd.f32 %v632, %v638
        %v641 = vadd.f32 %v633, %v638
        %v642 = vmax.f32 %v640, 0.0
        %v643 = vmax.f32 %v641, 0.0
        %v646 = vadd.s32 %v642, 4913932
        %v647 = vadd.s32 %v643, 4913932
        %v648 = vshra.s32 %v646, 23
        %v649 = vshra.s32 %v647, 23
        %v650 = vsub.s32 %v648, 127
        %v651 = vsub.s32 %v649, 127
        %vm652 = vcmp.gt.s32.totalorder %v650, 4294967281
        %v653 = vsel %vm652, %v650, 4294967281
        %vm654 = vcmp.gt.s32.totalorder %v651, 4294967281
        %v655 = vsel %vm654, %v651, 4294967281
        %vm656 = vcmp.lt.s32.totalorder %v653, 0
        %v657 = vsel %vm656, %v653, 0
        %vm658 = vcmp.lt.s32.totalorder %v655, 0
        %v659 = vsel %vm658, %v655, 0
        %v660 = vadd.s32 %v657, 127
        %v661 = vadd.s32 %v659, 127
        %v662 = vshll.u32 %v660, 23
        %v663 = vshll.u32 %v661, 23
        %vm666 = vcmp.gt.f32.partialorder %v642, 0.0
        %vm667 = vcmp.gt.f32.partialorder %v643, 0.0
        %v668 = vsel %vm666, %v662, 0.0
        %v669 = vsel %vm667, %v663, 0.0
        %v670 = vpack.c.bf16 %v668, %v668
        %v671 = vpack.c.bf16 %v669, %v669
        %v672 = vld [vmem:[%s4] sm:$0xf]
        %v673 = vld [vmem:[%s5] sm:$0xff]
        %675 = vset.pattern.permute.xlu0 0
        %676 = vperm.xlu0 %675, %v673
        %v677 = vpop.permute.xlu0 %676
        %vm679 = vcmask 31744
        %v681 = vsel %vm679, %v672, 0
        %v684 = vsel %vm300, %v670, 0
        %v687 = vsel %vm300, %v671, 0
        %689 = vmatpush.bf16.msra.mxu0 0
        %690 = vmatpush.bf16.msra.mxu0 0
        %691 = vmatpush.bf16.msra.mxu0 0
        %692 = vmatpush.bf16.msra.mxu0 0
        %693 = vmatpush.bf16.msra.mxu0 0
        %694 = vmatpush.bf16.msra.mxu0 0
        %695 = vmatpush.bf16.msra.mxu0 0
        %696 = vmatpush.bf16.msra.mxu0 %v684
        %697 = vmatmul.bf16.gmra.mxu0 %v681
        %v698 = vpop.f32.mrf.mxu0
        %v699 = vadd.f32 %v677, %v698
        %v700 = vpop.f32.mrf.mxu0
        %701 = vdwg.mxu0
        %702 = vmatpush.bf16.msra.mxu0 0
        %703 = vmatpush.bf16.msra.mxu0 0
        %704 = vmatpush.bf16.msra.mxu0 0
        %705 = vmatpush.bf16.msra.mxu0 0
        %706 = vmatpush.bf16.msra.mxu0 0
        %707 = vmatpush.bf16.msra.mxu0 0
        %708 = vmatpush.bf16.msra.mxu0 0
        %709 = vmatpush.bf16.msra.mxu0 %v687
        %710 = vmatmul.bf16.gmra.mxu0 %v681
        %v711 = vpop.f32.mrf.mxu0
        %v712 = vadd.f32 %v677, %v711
        %v713 = vpop.f32.mrf.mxu0
        %714 = vdwg.mxu0
        %v715 = vmax.f32 %v699, 0.0
        %v716 = vmax.f32 %v712, 0.0
        %v719 = vadd.s32 %v715, 4913932
        %v720 = vadd.s32 %v716, 4913932
        %v721 = vshra.s32 %v719, 23
        %v722 = vshra.s32 %v720, 23
        %v723 = vsub.s32 %v721, 127
        %v724 = vsub.s32 %v722, 127
        %vm725 = vcmp.gt.s32.totalorder %v723, 4294967281
        %v726 = vsel %vm725, %v723, 4294967281
        %vm727 = vcmp.gt.s32.totalorder %v724, 4294967281
        %v728 = vsel %vm727, %v724, 4294967281
        %vm729 = vcmp.lt.s32.totalorder %v726, 0
        %v730 = vsel %vm729, %v726, 0
        %vm731 = vcmp.lt.s32.totalorder %v728, 0
        %v732 = vsel %vm731, %v728, 0
        %v733 = vadd.s32 %v730, 127
        %v734 = vadd.s32 %v732, 127
        %v735 = vshll.u32 %v733, 23
        %v736 = vshll.u32 %v734, 23
        %vm739 = vcmp.gt.f32.partialorder %v715, 0.0
        %vm740 = vcmp.gt.f32.partialorder %v716, 0.0
        %v741 = vsel %vm739, %v735, 0.0
        %v742 = vsel %vm740, %v736, 0.0
        %v743 = vpack.c.bf16 %v742, %v741
        %744 = vst [vmem:[%s283] sm:$0xff] %v743
        %s745 = sand.u32 %s176, 1
        %s746 = scalar_lea.sflag [#allocation6], %s745
        %s747 = sand.u32 %s176, 1
        %s748 = smul.addr %s747, 8
        %s749 = scalar_lea.vmem [#allocation7], %s748
        // Predicated region
        $region49: #{tpu_custom_call.1} parent=43 // pred_check
          %p750 = pneg %p186
        $region50: #{tpu_custom_call.1} parent=43 // pred_check_branch
          %752 = sbr.rel (%p750) target = $region52
        $region51: #{tpu_custom_call.1} parent=43 // pred_region
          %s753 = smul.u32 2, %s28
          %755 = vsyncadd %s746, 0
          %s756 = smul.addr %s27, 2
          %s757 = sadd.s32 %s753, %s756
          %s758 = smul.addr %s757, 4
          %s759 = scalar_lea.hbm %s6, %s758
          %s761 = sshll.u32 %s749, 4
          %s762 = int_to_ptr.vmem [resolvable:$true] %s761
          %s763 = sshll.u32 %s759, 4
          %s764 = int_to_ptr.hbm [resolvable:$true] %s763
          %766 = dma.vmem_to_hbm [thread:$0]  %s762, 128, %s764, %s746
        $region52: #{tpu_custom_call.1} parent=43 // pred_fallthru
          _
      $region44: #{tpu_custom_call.1} parent=5 // pred_fallthru
        _
      %p767 = scmp.le.s32.totalorder 2, %s18
      // Predicated region
      $region53: #{tpu_custom_call.1} parent=5 // pred_check
        %p768 = pneg %p767
      $region54: #{tpu_custom_call.1} parent=5 // pred_check_branch
        %770 = sbr.rel (%p768) target = $region56
      $region55: #{tpu_custom_call.1} parent=5 // pred_region
        %s771 = ssub.s32 %s18, 2
        // Predicated region
        $region57: #{tpu_custom_call.1} parent=55 // pred_check
          %p772 = pneg %p192
        $region58: #{tpu_custom_call.1} parent=55 // pred_check_branch
          %774 = sbr.rel (%p772) target = $region60
        $region59: #{tpu_custom_call.1} parent=55 // pred_region
          %s775 = sand.u32 %s177, 1
          %s776 = scalar_lea.sflag [#allocation6], %s775
          %s777 = sand.u32 %s177, 1
          %s778 = smul.addr %s777, 8
          %s779 = scalar_lea.vmem [#allocation7], %s778
          %781 = dma.done %s776, 128
        $region60: #{tpu_custom_call.1} parent=55 // pred_fallthru
          _
      $region56: #{tpu_custom_call.1} parent=5 // pred_fallthru
        _
    $region6: #{tpu_custom_call.1} parent=1 // loop_footer
      %s22 = sadd.s32 1, %s18
    $region7: #{tpu_custom_call.1} parent=1 // loop_footer_branch
      %17 = sbr.rel target = $region3
    $region8: #{tpu_custom_call.1} parent=1 // loop_exit
      _
    %782 = vsyncpa [#allocation5], 1
    %s783 = scalar_lea.sflag [#allocation5], 1
    %784 = vsyncpa %s783, 1
    %785 = vsyncpa [#allocation6], 1
    %s786 = scalar_lea.sflag [#allocation6], 1
    %787 = vsyncpa %s786, 1

</llo_original>
